<compile_context>
chip_gen: v6e
topology: v6e:2x2x1
jax: 0.10.0
libtpu: 0.0.40
codegen_flags: <defaults>
</compile_context>

<pallas_src>
import math

import jax
import jax.numpy as jnp
import numpy as np
from jax.experimental import pallas as pl
from jax.experimental.pallas import tpu as pltpu

# Standard fixed filters referenced by the PyTorch module (each one is the
# single 3x3 kernel repeated per channel as a depthwise/grouped conv).
SOBEL_X = ((-1.0, 0.0, 1.0),
           (-2.0, 0.0, 2.0),
           (-1.0, 0.0, 1.0))
SOBEL_Y = ((-1.0, -2.0, -1.0),
           ( 0.0,  0.0,  0.0),
           ( 1.0,  2.0,  1.0))
LAPLACE = (( 0.0,  1.0,  0.0),
           ( 1.0, -4.0,  1.0),
           ( 0.0,  1.0,  0.0))
SHARPEN = (( 0.0, -1.0,  0.0),
           (-1.0,  5.0, -1.0),
           ( 0.0, -1.0,  0.0))
FILTERS = (SOBEL_X, SOBEL_Y, LAPLACE, SHARPEN)


def _gap_weight_map(filters, H, W):
    """Per-pixel weight w[r, c] such that

        mean_{i,j}( conv2d(x, sum(filters), padding=1)[c, i, j] )
            == sum_{r,c} w[r, c] * x[c, r, c]

    Derivation: for tap (di, dj) of the (combined) 3x3 kernel K, the windowed
    sum over the padded input touches every x row except row H-1 (di=0) / row 0
    (di=2), and every column except col W-1 (dj=0) / col 0 (dj=2).  So
        w[r, c] = sum_{di,dj} K[di,dj] * row_inc[di, r] * col_inc[dj, c]
    The 1/(H*W) of the mean is folded in as well.
    """
    K = np.zeros((3, 3), np.float64)
    for f in filters:
        K += np.asarray(f, np.float64)
    row_inc = np.stack([np.arange(H) != H - 1,
                        np.ones(H, bool),
                        np.arange(H) != 0]).astype(np.float64)        # (3, H)
    col_inc = np.stack([np.arange(W) != W - 1,
                        np.ones(W, bool),
                        np.arange(W) != 0]).astype(np.float64)        # (3, W)
    w = np.einsum("ij,ir,jc->rc", K, row_inc, col_inc) / float(H * W)  # (H, W)
    return jnp.asarray(w.reshape(1, 1, H * W), jnp.float32)


def _pick_batch_tile(N, target=128):
    """Largest divisor of N that is <= target, while keeping >= 2 grid steps
    (so v7x's two TensorCores both get work) whenever N > 1."""
    bt = min(target, max(1, N // 2)) if N > 1 else 1
    while N % bt:
        bt -= 1
    return bt


def filter_atten_kernel(x_ref, gw_ref, w1t_ref, b1_ref, w2t_ref, b2_ref, out_ref):
    """One batch tile per grid step.

    x_ref  : (BT, C, H*W)  input tile, lane-dense last dim
    gw_ref : (1, 1, H*W)   folded conv+GAP per-pixel weights (incl. 1/(H*W))
    w1t    : (C, C//2)     linear1 weight, pre-transposed
    b1     : (1, C//2)
    w2t    : (C//2, C)     linear2 weight, pre-transposed
    b2     : (1, C)
    out    : (BT, C, H*W)
    """
    x = x_ref[...].astype(jnp.float32)                     # (BT, C, HW)

    # Conv(4 filters) + global average pool, collapsed to one weighted reduce.
    gap = jnp.sum(x * gw_ref[...], axis=-1)                # (BT, C)

    # linear1 -> ReLU -> linear2
    h = jnp.dot(gap, w1t_ref[...], preferred_element_type=jnp.float32) + b1_ref[...]
    h = jnp.maximum(h, 0.0)
    logits = (jnp.dot(h, w2t_ref[...], preferred_element_type=jnp.float32)
              + b2_ref[...])                               # (BT, C)

    # softmax over the channel dim
    logits = logits - jnp.max(logits, axis=1, keepdims=True)
    e = jnp.exp(logits)
    atten = e * pl.reciprocal(jnp.sum(e, axis=1, keepdims=True), approx=True)

    # atten.view(N, C, 1, 1) * x   (lane-broadcast, lane-dense store)
    out_ref[...] = (x * atten[:, :, None]).astype(out_ref.dtype)


def filter_atten(x, w1, b1, w2, b2, *, batch_tile=None):
    """x: (N, C, H, W).  w1: (C//2, C), b1: (C//2,), w2: (C, C//2), b2: (C,)."""
    N, C, H, W = x.shape
    Ch = C // 2
    HW = H * W

    bt = batch_tile if batch_tile is not None else _pick_batch_tile(N)
    assert N % bt == 0

    # Glue (all free / tiny): flatten spatial dims (no data movement for a
    # contiguous NCHW array), pre-transpose the Linear weights, build the
    # folded conv+GAP weight map.
    xf = x.reshape(N, C, HW)
    gw = _gap_weight_map(FILTERS, H, W)      # (1, 1, HW)
    w1t = w1.T                               # (C, C//2)
    w2t = w2.T                               # (C//2, C)
    b1r = b1.reshape(1, Ch)
    b2r = b2.reshape(1, C)

    out_flat = pl.pallas_call(
        filter_atten_kernel,
        out_shape=jax.ShapeDtypeStruct((N, C, HW), x.dtype),
        grid_spec=pltpu.PrefetchScalarGridSpec(
            num_scalar_prefetch=0,
            grid=(N // bt,),
            in_specs=[
                pl.BlockSpec((bt, C, HW), lambda b: (b, 0, 0)),
                pl.BlockSpec((1, 1, HW), lambda b: (0, 0, 0)),
                pl.BlockSpec((C, Ch), lambda b: (0, 0)),
                pl.BlockSpec((1, Ch), lambda b: (0, 0)),
                pl.BlockSpec((Ch, C), lambda b: (0, 0)),
                pl.BlockSpec((1, C), lambda b: (0, 0)),
            ],
            out_specs=pl.BlockSpec((bt, C, HW), lambda b: (b, 0, 0)),
        ),
        compiler_params=pltpu.CompilerParams(
            dimension_semantics=("parallel",),
            # Blocks are small (<= ~2 MiB double-buffered at bt=128); this stays
            # well inside v7x's 64 MiB physical VMEM.
            vmem_limit_bytes=32 * 1024 * 1024,
        ),
    )(xf, gw, w1t, b1r, w2t, b2r)

    return out_flat.reshape(N, C, H, W)


def filter_atten_reference(x, w1, b1, w2, b2):
    """Pure-JAX reference mirroring the PyTorch forward (direct convs)."""
    N, C, H, W = x.shape
    xp = jnp.pad(x, ((0, 0), (0, 0), (1, 1), (1, 1)))
    conv_outs = []
    for filt in FILTERS:
        acc = jnp.zeros_like(x)
        for di in range(3):
            for dj in range(3):
                acc = acc + float(filt[di][dj]) * xp[:, :, di:di + H, dj:dj + W]
        conv_outs.append(acc)
    atten_map = conv_outs[0] + conv_outs[1] + conv_outs[2] + conv_outs[3]
    gap = atten_map.mean(axis=(2, 3))                      # (N, C)
    h = jnp.maximum(gap @ w1.T + b1, 0.0)
    logits = h @ w2.T + b2
    atten = jax.nn.softmax(logits, axis=1)
    return x * atten[:, :, None, None]


if __name__ == "__main__":
    # Small shapes consistent with the module: HW=16, inplane=4, batch=2.
    N, C, H, W = 2, 4, 16, 16
    Ch = C // 2

    key = jax.random.PRNGKey(0)
    kx, k1, k2, k3, k4, kx2 = jax.random.split(key, 6)
    x = jax.random.normal(kx, (N, C, H, W), dtype=jnp.float32)

    # Deterministic synthetic Linear parameters (PyTorch Linear shapes).
    w1 = jax.random.normal(k1, (Ch, C), dtype=jnp.float32) * 0.5   # linear1.weight
    b1 = jax.random.normal(k2, (Ch,), dtype=jnp.float32) * 0.1     # linear1.bias
    w2 = jax.random.normal(k3, (C, Ch), dtype=jnp.float32) * 0.5   # linear2.weight
    b2 = jax.random.normal(k4, (C,), dtype=jnp.float32) * 0.1      # linear2.bias

    out = jax.block_until_ready(filter_atten(x, w1, b1, w2, b2))
    ref = jax.block_until_ready(filter_atten_reference(x, w1, b1, w2, b2))
    assert out.shape == (N, C, H, W)
    assert jnp.allclose(out, ref, atol=1e-3, rtol=1e-3), "mismatch vs reference"

    # Also exercise the batched (bt > 1, multi-step grid) path.
    x_big = jax.random.normal(kx2, (8, C, H, W), dtype=jnp.float32)
    out_big = jax.block_until_ready(filter_atten(x_big, w1, b1, w2, b2))
    ref_big = jax.block_until_ready(filter_atten_reference(x_big, w1, b1, w2, b2))
    assert jnp.allclose(out_big, ref_big, atol=1e-3, rtol=1e-3), "batched mismatch"

    print("KERNEL_OK")
</pallas_src>

<mosaic_0001>
module attributes {stable_mosaic.version = 11 : i64} {
  func.func @filter_atten_kernel(%arg0: i32, %arg1: memref<1x4x256xf32, #tpu.memory_space<vmem>>, %arg2: memref<1x1x256xf32, #tpu.memory_space<vmem>>, %arg3: memref<4x2xf32, #tpu.memory_space<vmem>>, %arg4: memref<1x2xf32, #tpu.memory_space<vmem>>, %arg5: memref<2x4xf32, #tpu.memory_space<vmem>>, %arg6: memref<1x4xf32, #tpu.memory_space<vmem>>, %arg7: memref<1x4x256xf32, #tpu.memory_space<vmem>>) attributes {dimension_semantics = [#tpu.dimension_semantics<parallel>], iteration_bounds = array<i64: 2>, scalar_prefetch = 0 : i64, scratch_operands = 0 : i64, tpu.core_type = #tpu.core_type<tc>, window_params = [{transform_indices = @transform_0, window_bounds = array<i64: 1, 4, 256>}, {pipeline_mode = #tpu.pipeline_mode<synchronous>, transform_indices = @transform_1, window_bounds = array<i64: 1, 1, 256>}, {pipeline_mode = #tpu.pipeline_mode<synchronous>, transform_indices = @transform_2, window_bounds = array<i64: 4, 2>}, {pipeline_mode = #tpu.pipeline_mode<synchronous>, transform_indices = @transform_3, window_bounds = array<i64: 1, 2>}, {pipeline_mode = #tpu.pipeline_mode<synchronous>, transform_indices = @transform_4, window_bounds = array<i64: 2, 4>}, {pipeline_mode = #tpu.pipeline_mode<synchronous>, transform_indices = @transform_5, window_bounds = array<i64: 1, 4>}, {transform_indices = @transform_6, window_bounds = array<i64: 1, 4, 256>}]} {
    %c0 = arith.constant 0 : index
    %c0_0 = arith.constant 0 : index
    %c0_1 = arith.constant 0 : index
    %0 = vector.load %arg1[%c0, %c0_0, %c0_1] : memref<1x4x256xf32, #tpu.memory_space<vmem>>, vector<1x4x256xf32>
    %c0_2 = arith.constant 0 : index
    %c0_3 = arith.constant 0 : index
    %c0_4 = arith.constant 0 : index
    %1 = vector.load %arg2[%c0_2, %c0_3, %c0_4] : memref<1x1x256xf32, #tpu.memory_space<vmem>>, vector<1x1x256xf32>
    %2 = vector.broadcast %1 : vector<1x1x256xf32> to vector<1x4x256xf32>
    %3 = arith.mulf %0, %2 : vector<1x4x256xf32>
    %cst = arith.constant dense<0.000000e+00> : vector<1x4xf32>
    %4 = vector.multi_reduction <add>, %3, %cst [2] : vector<1x4x256xf32> to vector<1x4xf32>
    %c0_5 = arith.constant 0 : index
    %c0_6 = arith.constant 0 : index
    %5 = vector.load %arg3[%c0_5, %c0_6] : memref<4x2xf32, #tpu.memory_space<vmem>>, vector<4x2xf32>
    %cst_7 = arith.constant dense<0.000000e+00> : vector<1x2xf32>
    %6 = tpu.matmul %4, %5, %cst_7 {dimension_numbers = #tpu.dot_dimension_numbers<[1], [0], [0], [1], [0, 0, 1, 1], [], []>} : vector<1x4xf32>, vector<4x2xf32>, vector<1x2xf32> -> vector<1x2xf32>
    %c0_8 = arith.constant 0 : index
    %c0_9 = arith.constant 0 : index
    %7 = vector.load %arg4[%c0_8, %c0_9] : memref<1x2xf32, #tpu.memory_space<vmem>>, vector<1x2xf32>
    %8 = arith.addf %6, %7 : vector<1x2xf32>
    %cst_10 = arith.constant 0.000000e+00 : f32
    %9 = vector.broadcast %cst_10 : f32 to vector<1x2xf32>
    %10 = arith.maximumf %8, %9 : vector<1x2xf32>
    %c0_11 = arith.constant 0 : index
    %c0_12 = arith.constant 0 : index
    %11 = vector.load %arg5[%c0_11, %c0_12] : memref<2x4xf32, #tpu.memory_space<vmem>>, vector<2x4xf32>
    %cst_13 = arith.constant dense<0.000000e+00> : vector<1x4xf32>
    %12 = tpu.matmul %10, %11, %cst_13 {dimension_numbers = #tpu.dot_dimension_numbers<[1], [0], [0], [1], [0, 0, 1, 1], [], []>} : vector<1x2xf32>, vector<2x4xf32>, vector<1x4xf32> -> vector<1x4xf32>
    %c0_14 = arith.constant 0 : index
    %c0_15 = arith.constant 0 : index
    %13 = vector.load %arg6[%c0_14, %c0_15] : memref<1x4xf32, #tpu.memory_space<vmem>>, vector<1x4xf32>
    %14 = arith.addf %12, %13 : vector<1x4xf32>
    %cst_16 = arith.constant dense<0xFF800000> : vector<1xf32>
    %15 = vector.multi_reduction <maximumf>, %14, %cst_16 [1] : vector<1x4xf32> to vector<1xf32>
    %16 = vector.shape_cast %15 : vector<1xf32> to vector<1x1xf32>
    %17 = vector.broadcast %16 : vector<1x1xf32> to vector<1x4xf32>
    %18 = arith.subf %14, %17 : vector<1x4xf32>
    %19 = math.exp %18 : vector<1x4xf32>
    %cst_17 = arith.constant dense<0.000000e+00> : vector<1xf32>
    %20 = vector.multi_reduction <add>, %19, %cst_17 [1] : vector<1x4xf32> to vector<1xf32>
    %21 = vector.shape_cast %20 : vector<1xf32> to vector<1x1xf32>
    %22 = tpu.reciprocal %21 {approx = true} : vector<1x1xf32> -> vector<1x1xf32>
    %23 = vector.broadcast %22 : vector<1x1xf32> to vector<1x4xf32>
    %24 = arith.mulf %19, %23 : vector<1x4xf32>
    %25 = vector.shape_cast %24 : vector<1x4xf32> to vector<1x4x1xf32>
    %26 = vector.broadcast %25 : vector<1x4x1xf32> to vector<1x4x256xf32>
    %27 = arith.mulf %0, %26 : vector<1x4x256xf32>
    %c0_18 = arith.constant 0 : index
    %c0_19 = arith.constant 0 : index
    %c0_20 = arith.constant 0 : index
    %28 = vector.load %arg7[%c0_18, %c0_19, %c0_20] : memref<1x4x256xf32, #tpu.memory_space<vmem>>, vector<1x4x256xf32>
    tpu.vector_store %arg7[%c0_18, %c0_19, %c0_20], %27 {strides = array<i32>} : memref<1x4x256xf32, #tpu.memory_space<vmem>>, vector<1x4x256xf32>,
    return
  }
  func.func @transform_0(%arg0: i32) -> (i32, i32, i32) {
    %c0_i32 = arith.constant 0 : i32
    %c0_i32_0 = arith.constant 0 : i32
    %c0_i32_1 = arith.constant 0 : i32
    return %arg0, %c0_i32, %c0_i32_0 : i32, i32, i32
  }
  func.func @transform_1(%arg0: i32) -> (i32, i32, i32) {
    %c0_i32 = arith.constant 0 : i32
    %c0_i32_0 = arith.constant 0 : i32
    %c0_i32_1 = arith.constant 0 : i32
    %c0_i32_2 = arith.constant 0 : i32
    return %c0_i32, %c0_i32_0, %c0_i32_1 : i32, i32, i32
  }
  func.func @transform_2(%arg0: i32) -> (i32, i32) {
    %c0_i32 = arith.constant 0 : i32
    %c0_i32_0 = arith.constant 0 : i32
    %c0_i32_1 = arith.constant 0 : i32
    return %c0_i32, %c0_i32_0 : i32, i32
  }
  func.func @transform_3(%arg0: i32) -> (i32, i32) {
    %c0_i32 = arith.constant 0 : i32
    %c0_i32_0 = arith.constant 0 : i32
    %c0_i32_1 = arith.constant 0 : i32
    return %c0_i32, %c0_i32_0 : i32, i32
  }
  func.func @transform_4(%arg0: i32) -> (i32, i32) {
    %c0_i32 = arith.constant 0 : i32
    %c0_i32_0 = arith.constant 0 : i32
    %c0_i32_1 = arith.constant 0 : i32
    return %c0_i32, %c0_i32_0 : i32, i32
  }
  func.func @transform_5(%arg0: i32) -> (i32, i32) {
    %c0_i32 = arith.constant 0 : i32
    %c0_i32_0 = arith.constant 0 : i32
    %c0_i32_1 = arith.constant 0 : i32
    return %c0_i32, %c0_i32_0 : i32, i32
  }
  func.func @transform_6(%arg0: i32) -> (i32, i32, i32) {
    %c0_i32 = arith.constant 0 : i32
    %c0_i32_0 = arith.constant 0 : i32
    %c0_i32_1 = arith.constant 0 : i32
    return %arg0, %c0_i32, %c0_i32_0 : i32, i32, i32
  }
}

</mosaic_0001>

<llo_original>
// kernel: tpu_custom_call.1
$region0: #{tpu_custom_call.1}
  #allocation0 [shape = 'u32[]', space=smem, size = 0x4, offset = 0x4, fixed_abs, tag = 'smem constant byte address 0x4 - core index']
  #allocation1 [shape = 'u32[144,128]{1,0:T(1,128)}', space=vmem, size = 0x12000, scoped, tag = 'internal scratch']
  %s0 = inlined_call_operand.hbm [shape: f32[2,4,256], index: 0, kind: input, shape index: {}]
  %s1 = inlined_call_operand.vmem [shape: f32[1,1,256], index: 1, kind: input, shape index: {}]
  %s2 = inlined_call_operand.vmem [shape: f32[4,2], index: 2, kind: input, shape index: {}]
  %s3 = inlined_call_operand.vmem [shape: f32[1,2], index: 3, kind: input, shape index: {}]
  %s4 = inlined_call_operand.vmem [shape: f32[2,4], index: 4, kind: input, shape index: {}]
  %s5 = inlined_call_operand.vmem [shape: f32[1,4], index: 5, kind: input, shape index: {}]
  %s6 = inlined_call_operand.hbm [shape: f32[2,4,256], index: 6, kind: output, shape index: {}]
  %s7 = sld [smem:[#allocation0]]
  $region61: #{tpu_custom_call.1} parent=0
    _
  %s9 = ssub.s32 1, %s7
  %s10 = scalar_select 0, %s9, %s7
  $region1: #{tpu_custom_call.1} parent=0
    #allocation2 [shape = 'u8[8192]{0}', space=vmem, size = 0x2000, scoped, tag = 'input window, operand 0']
    #allocation3 [shape = 's32[2]{0}', space=sflag, size = 0x8, scoped, tag = 'scoped memory for tpu_custom_call.1']
    #allocation4 [shape = 's32[2]{0}', space=sflag, size = 0x8, scoped, tag = 'scoped memory for tpu_custom_call.1']
    #allocation5 [shape = 'u8[8192]{0}', space=vmem, size = 0x2000, scoped, tag = 'output window, operand 0']
    %11 = vsyncpa [#allocation3], 0
    %s12 = scalar_lea.sflag [#allocation3], 1
    %13 = vsyncpa %s12, 0
    %14 = vsyncpa [#allocation4], 0
    %s15 = scalar_lea.sflag [#allocation4], 1
    %16 = vsyncpa %s15, 0
    loop: start=0, step=1, limit=4
    $region2: #{tpu_custom_call.1} parent=1 // loop_pre_header
      _
    $region3: #{tpu_custom_call.1} parent=1 // loop_header
      %s18 = sphi 0, %s22
      %p19 = scmp.ge.s32.totalorder %s18, 4
      %s28 = sphi 0, %s30
      %s31 = sphi 0, %s28
      %s32 = sphi 0, %s31
      %s48 = sphi 0, %s32
      %s52 = sphi 0, %s52
      %s54 = sphi 0, %s52
      %s55 = sphi 0, %s54
      %s69 = sphi 0, %s55
      %s73 = sphi 0, %s73
      %s75 = sphi 0, %s73
      %s76 = sphi 0, %s75
      %s90 = sphi 0, %s76
      %s94 = sphi 0, %s94
      %s96 = sphi 0, %s94
      %s97 = sphi 0, %s96
      %s111 = sphi 0, %s97
      %s115 = sphi 0, %s115
      %s117 = sphi 0, %s115
      %s118 = sphi 0, %s117
      %s132 = sphi 0, %s118
      %s136 = sphi 0, %s136
      %s138 = sphi 0, %s136
      %s139 = sphi 0, %s138
      %s153 = sphi 0, %s139
      %s159 = sphi 0, %s161
      %s162 = sphi 0, %s159
      %s163 = sphi 0, %s162
      %s179 = sphi 0, %s163
    $region4: #{tpu_custom_call.1} parent=1 // loop_header_branch
      %21 = sbr.rel (%p19) target = $region8
    $region5: #{tpu_custom_call.1} parent=1 // loop_body
      %s23 = ssub.s32 %s18, 1
      %s24 = ssub.s32 %s18, 2
      %s25 = sadd.s32 %s18, 1
      %s26 = ssub.s32 %s18, %s25
      %p27 = scmp.eq.s32.totalorder %s26, 0
      %s29 = sadd.s32 %s28, 1
      %s30 = scalar_select %p27, %s28, %s29
      %p33 = pneg %p27
      %p34 = scmp.eq.s32.totalorder %s18, 1
      %p35 = por %p33, %p34
      %p36 = scmp.ne.s32.totalorder %s28, %s31
      %p37 = scmp.eq.s32.totalorder %s18, 0
      %p38 = por %p36, %p37
      %p39 = scmp.ne.s32.totalorder %s28, %s31
      %p40 = scmp.eq.s32.totalorder %s23, 1
      %p41 = por %p39, %p40
      %p42 = scmp.ne.s32.totalorder %s31, %s32
      %p43 = scmp.eq.s32.totalorder %s23, 0
      %p44 = por %p42, %p43
      %p45 = scmp.ne.s32.totalorder %s31, %s32
      %p46 = scmp.eq.s32.totalorder %s24, 1
      %p47 = por %p45, %p46
      %p49 = scmp.ne.s32.totalorder %s32, %s48
      %p50 = scmp.eq.s32.totalorder %s24, 0
      %p51 = por %p49, %p50
      %s53 = sadd.s32 %s52, 1
      %p56 = scmp.eq.s32.totalorder %s18, 1
      %p57 = scmp.ne.s32.totalorder %s52, %s54
      %p58 = scmp.eq.s32.totalorder %s18, 0
      %p59 = por %p57, %p58
      %p60 = scmp.ne.s32.totalorder %s52, %s54
      %p61 = scmp.eq.s32.totalorder %s23, 1
      %p62 = por %p60, %p61
      %p63 = scmp.ne.s32.totalorder %s54, %s55
      %p64 = scmp.eq.s32.totalorder %s23, 0
      %p65 = por %p63, %p64
      %p66 = scmp.ne.s32.totalorder %s54, %s55
      %p67 = scmp.eq.s32.totalorder %s24, 1
      %p68 = por %p66, %p67
      %p70 = scmp.ne.s32.totalorder %s55, %s69
      %p71 = scmp.eq.s32.totalorder %s24, 0
      %p72 = por %p70, %p71
      %s74 = sadd.s32 %s73, 1
      %p77 = scmp.eq.s32.totalorder %s18, 1
      %p78 = scmp.ne.s32.totalorder %s73, %s75
      %p79 = scmp.eq.s32.totalorder %s18, 0
      %p80 = por %p78, %p79
      %p81 = scmp.ne.s32.totalorder %s73, %s75
      %p82 = scmp.eq.s32.totalorder %s23, 1
      %p83 = por %p81, %p82
      %p84 = scmp.ne.s32.totalorder %s75, %s76
      %p85 = scmp.eq.s32.totalorder %s23, 0
      %p86 = por %p84, %p85
      %p87 = scmp.ne.s32.totalorder %s75, %s76
      %p88 = scmp.eq.s32.totalorder %s24, 1
      %p89 = por %p87, %p88
      %p91 = scmp.ne.s32.totalorder %s76, %s90
      %p92 = scmp.eq.s32.totalorder %s24, 0
      %p93 = por %p91, %p92
      %s95 = sadd.s32 %s94, 1
      %p98 = scmp.eq.s32.totalorder %s18, 1
      %p99 = scmp.ne.s32.totalorder %s94, %s96
      %p100 = scmp.eq.s32.totalorder %s18, 0
      %p101 = por %p99, %p100
      %p102 = scmp.ne.s32.totalorder %s94, %s96
      %p103 = scmp.eq.s32.totalorder %s23, 1
      %p104 = por %p102, %p103
      %p105 = scmp.ne.s32.totalorder %s96, %s97
      %p106 = scmp.eq.s32.totalorder %s23, 0
      %p107 = por %p105, %p106
      %p108 = scmp.ne.s32.totalorder %s96, %s97
      %p109 = scmp.eq.s32.totalorder %s24, 1
      %p110 = por %p108, %p109
      %p112 = scmp.ne.s32.totalorder %s97, %s111
      %p113 = scmp.eq.s32.totalorder %s24, 0
      %p114 = por %p112, %p113
      %s116 = sadd.s32 %s115, 1
      %p119 = scmp.eq.s32.totalorder %s18, 1
      %p120 = scmp.ne.s32.totalorder %s115, %s117
      %p121 = scmp.eq.s32.totalorder %s18, 0
      %p122 = por %p120, %p121
      %p123 = scmp.ne.s32.totalorder %s115, %s117
      %p124 = scmp.eq.s32.totalorder %s23, 1
      %p125 = por %p123, %p124
      %p126 = scmp.ne.s32.totalorder %s117, %s118
      %p127 = scmp.eq.s32.totalorder %s23, 0
      %p128 = por %p126, %p127
      %p129 = scmp.ne.s32.totalorder %s117, %s118
      %p130 = scmp.eq.s32.totalorder %s24, 1
      %p131 = por %p129, %p130
      %p133 = scmp.ne.s32.totalorder %s118, %s132
      %p134 = scmp.eq.s32.totalorder %s24, 0
      %p135 = por %p133, %p134
      %s137 = sadd.s32 %s136, 1
      %p140 = scmp.eq.s32.totalorder %s18, 1
      %p141 = scmp.ne.s32.totalorder %s136, %s138
      %p142 = scmp.eq.s32.totalorder %s18, 0
      %p143 = por %p141, %p142
      %p144 = scmp.ne.s32.totalorder %s136, %s138
      %p145 = scmp.eq.s32.totalorder %s23, 1
      %p146 = por %p144, %p145
      %p147 = scmp.ne.s32.totalorder %s138, %s139
      %p148 = scmp.eq.s32.totalorder %s23, 0
      %p149 = por %p147, %p148
      %p150 = scmp.ne.s32.totalorder %s138, %s139
      %p151 = scmp.eq.s32.totalorder %s24, 1
      %p152 = por %p150, %p151
      %p154 = scmp.ne.s32.totalorder %s139, %s153
      %p155 = scmp.eq.s32.totalorder %s24, 0
      %p156 = por %p154, %p155
      %s157 = ssub.s32 %s18, %s25
      %p158 = scmp.eq.s32.totalorder %s157, 0
      %s160 = sadd.s32 %s159, 1
      %s161 = scalar_select %p158, %s159, %s160
      %p164 = pneg %p158
      %p165 = scmp.eq.s32.totalorder %s18, 1
      %p166 = por %p164, %p165
      %p167 = scmp.ne.s32.totalorder %s159, %s162
      %p168 = scmp.eq.s32.totalorder %s18, 0
      %p169 = por %p167, %p168
      %p170 = scmp.ne.s32.totalorder %s159, %s162
      %p171 = scmp.eq.s32.totalorder %s23, 1
      %p172 = por %p170, %p171
      %p173 = scmp.ne.s32.totalorder %s162, %s163
      %p174 = scmp.eq.s32.totalorder %s23, 0
      %p175 = por %p173, %p174
      %p176 = scmp.ne.s32.totalorder %s162, %s163
      %p177 = scmp.eq.s32.totalorder %s24, 1
      %p178 = por %p176, %p177
      %p180 = scmp.ne.s32.totalorder %s163, %s179
      %p181 = scmp.eq.s32.totalorder %s24, 0
      %p182 = por %p180, %p181
      %p183 = scmp.le.s32.totalorder 1, %s18
      %p184 = scmp.lt.s32.totalorder %s18, 3
      %p185 = pnand %p183, %p184
      %p186 = pneg %p185
      // Predicated region
      $region9: #{tpu_custom_call.1} parent=5 // pred_check
        _
      $region10: #{tpu_custom_call.1} parent=5 // pred_check_branch
        %188 = sbr.rel (%p185) target = $region12
      $region11: #{tpu_custom_call.1} parent=5 // pred_region
        %s189 = ssub.s32 %s18, 1
        // Predicated region
        $region13: #{tpu_custom_call.1} parent=11 // pred_check
          %p190 = pneg %p65
        $region14: #{tpu_custom_call.1} parent=11 // pred_check_branch
          %192 = sbr.rel (%p190) target = $region16
        $region15: #{tpu_custom_call.1} parent=11 // pred_region
          _
        $region16: #{tpu_custom_call.1} parent=11 // pred_fallthru
          _
        // Predicated region
        $region17: #{tpu_custom_call.1} parent=11 // pred_check
          %p193 = pneg %p86
        $region18: #{tpu_custom_call.1} parent=11 // pred_check_branch
          %195 = sbr.rel (%p193) target = $region20
        $region19: #{tpu_custom_call.1} parent=11 // pred_region
          _
        $region20: #{tpu_custom_call.1} parent=11 // pred_fallthru
          _
        // Predicated region
        $region21: #{tpu_custom_call.1} parent=11 // pred_check
          %p196 = pneg %p107
        $region22: #{tpu_custom_call.1} parent=11 // pred_check_branch
          %198 = sbr.rel (%p196) target = $region24
        $region23: #{tpu_custom_call.1} parent=11 // pred_region
          _
        $region24: #{tpu_custom_call.1} parent=11 // pred_fallthru
          _
        // Predicated region
        $region25: #{tpu_custom_call.1} parent=11 // pred_check
          %p199 = pneg %p128
        $region26: #{tpu_custom_call.1} parent=11 // pred_check_branch
          %201 = sbr.rel (%p199) target = $region28
        $region27: #{tpu_custom_call.1} parent=11 // pred_region
          _
        $region28: #{tpu_custom_call.1} parent=11 // pred_fallthru
          _
        // Predicated region
        $region29: #{tpu_custom_call.1} parent=11 // pred_check
          %p202 = pneg %p149
        $region30: #{tpu_custom_call.1} parent=11 // pred_check_branch
          %204 = sbr.rel (%p202) target = $region32
        $region31: #{tpu_custom_call.1} parent=11 // pred_region
          _
        $region32: #{tpu_custom_call.1} parent=11 // pred_fallthru
          _
      $region12: #{tpu_custom_call.1} parent=5 // pred_fallthru
        _
      %p205 = scmp.lt.s32.totalorder %s18, 2
      // Predicated region
      $region33: #{tpu_custom_call.1} parent=5 // pred_check
        %p206 = pneg %p205
      $region34: #{tpu_custom_call.1} parent=5 // pred_check_branch
        %208 = sbr.rel (%p206) target = $region36
      $region35: #{tpu_custom_call.1} parent=5 // pred_region
        // Predicated region
        $region37: #{tpu_custom_call.1} parent=35 // pred_check
          %p209 = pneg %p38
        $region38: #{tpu_custom_call.1} parent=35 // pred_check_branch
          %211 = sbr.rel (%p209) target = $region40
        $region39: #{tpu_custom_call.1} parent=35 // pred_region
          %s212 = sand.u32 %s28, 1
          %s213 = scalar_lea.sflag [#allocation3], %s212
          %s214 = sand.u32 %s28, 1
          %s215 = smul.addr %s214, 8
          %s216 = scalar_lea.vmem [#allocation2], %s215
          %s218 = ssub.s32 128, 128
          %219 = vsyncadd %s213, %s218
          %s220 = smul.addr %s18, 2
          %s221 = smul.addr %s220, 64
          %s222 = scalar_lea.hbm %s0, %s221
          %s224 = sshll.u32 %s216, 4
          %s225 = int_to_ptr.vmem [resolvable:$true] %s224
          %227 = dma.hbm_to_vmem [thread:$0]  %s222, 128, %s225, %s213
        $region40: #{tpu_custom_call.1} parent=35 // pred_fallthru
          _
      $region36: #{tpu_custom_call.1} parent=5 // pred_fallthru
        _
      %p228 = scmp.le.s32.totalorder 1, %s18
      %p229 = scmp.lt.s32.totalorder %s18, 3
      %p230 = pnand %p228, %p229
      %p231 = pneg %p230
      // Predicated region
      $region41: #{tpu_custom_call.1} parent=5 // pred_check
        _
      $region42: #{tpu_custom_call.1} parent=5 // pred_check_branch
        %233 = sbr.rel (%p230) target = $region44
      $region43: #{tpu_custom_call.1} parent=5 // pred_region
        %s234 = ssub.s32 %s18, 1
        %s235 = sand.u32 %s31, 1
        %s236 = scalar_lea.sflag [#allocation3], %s235
        %s237 = sand.u32 %s31, 1
        %s238 = smul.addr %s237, 8
        %s239 = scalar_lea.vmem [#allocation2], %s238
        // Predicated region
        $region45: #{tpu_custom_call.1} parent=43 // pred_check
          %p240 = pneg %p44
        $region46: #{tpu_custom_call.1} parent=43 // pred_check_branch
          %242 = sbr.rel (%p240) target = $region48
        $region47: #{tpu_custom_call.1} parent=43 // pred_region
          %243 = dma.done %s236, 128
        $region48: #{tpu_custom_call.1} parent=43 // pred_fallthru
          _
        %s244 = sand.u32 %s31, 1
        %s245 = scalar_lea.sflag [#allocation3], %s244
        %s246 = sand.u32 %s31, 1
        %s247 = smul.addr %s246, 8
        %s248 = scalar_lea.vmem [#allocation2], %s247
        %p249 = pneg %p44
        %p250 = pneg %p41
        %p251 = pneg %p65
        %p252 = pneg %p62
        %p253 = pneg %p86
        %p254 = pneg %p83
        %p255 = pneg %p107
        %p256 = pneg %p104
        %p257 = pneg %p128
        %p258 = pneg %p125
        %p259 = pneg %p149
        %p260 = pneg %p146
        %p261 = pneg %p175
        %p262 = pneg %p172
        %s263 = sand.u32 %s162, 1
        %s264 = scalar_lea.sflag [#allocation4], %s263
        %s265 = sand.u32 %s162, 1
        %s266 = smul.addr %s265, 8
        %s267 = scalar_lea.vmem [#allocation5], %s266
        %v268 = vld [vmem:[%s239] sm:$0xff]
        %v269 = vld [vmem:[%s1] sm:$0x3]
        %v271 = vlaneseq
        %v272 = vshrl.u32 %v271, 7
        %v273 = vsub.s32 0, %v272
        %v274 = vrot.slane %v269, %v273
        %v275 = vlaneseq
        %v276 = vshrl.u32 %v275, 7
        %v277 = vsub.s32 1, %v276
        %v278 = vrot.slane %v269, %v277
        %v279 = vcombine.low %v274, %v278
        %v281 = vmul.f32 %v268, %v279
        %v283 = vcombine.high %v281, %v281
        %vm285 = vcmask 1043456
        %v286 = vsel %vm285, %v281, 0.0
        %v287 = vsel %vm285, %v283, 0.0
        %v288 = vadd.f32 %v286, %v287
        %289 = vadd.xlane.f32.xlu0 %v288
        %v290 = vpop.xlane.xlu0 %289
        %v291 = vld [vmem:[%s2] sm:$0xf]
        %v292 = vld [vmem:[%s3] sm:$0x1]
        %v294 = vlaneseq
        %v295 = vand.u32 %v294, 127
        %v296 = vlaneseq
        %v297 = vshrl.u32 %v296, 7
        %v298 = vsub.s32 %v295, %v297
        %v299 = vrot.slane %v290, %v298
        %vm300 = vcmask 31744
        %v301 = vsel %vm300, %v299, 0
        %v304 = vsel %vm285, %v291, 0
        %306 = vmatprep.subr.mxu0 0.0
        %307 = vmatpush1.msra.mxu0 0.0
        %308 = vmatprep.subr.mxu0 0.0
        %309 = vmatpush1.msra.mxu0 0.0
        %310 = vmatprep.subr.mxu0 0.0
        %311 = vmatpush1.msra.mxu0 0.0
        %312 = vmatprep.subr.mxu0 0.0
        %313 = vmatpush1.msra.mxu0 0.0
        %314 = vmatprep.subr.mxu0 0.0
        %315 = vmatpush1.msra.mxu0 0.0
        %316 = vmatprep.subr.mxu0 0.0
        %317 = vmatpush1.msra.mxu0 0.0
        %318 = vmatprep.subr.mxu0 0.0
        %319 = vmatpush1.msra.mxu0 0.0
        %320 = vmatprep.subr.mxu0 0.0
        %321 = vmatpush1.msra.mxu0 0.0
        %322 = vmatprep.subr.mxu0 0.0
        %323 = vmatpush1.msra.mxu0 0.0
        %324 = vmatprep.subr.mxu0 0.0
        %325 = vmatpush1.msra.mxu0 0.0
        %326 = vmatprep.subr.mxu0 0.0
        %327 = vmatpush1.msra.mxu0 0.0
        %328 = vmatprep.subr.mxu0 0.0
        %329 = vmatpush1.msra.mxu0 0.0
        %330 = vmatprep.subr.mxu0 0.0
        %331 = vmatpush1.msra.mxu0 0.0
        %332 = vmatprep.subr.mxu0 0.0
        %333 = vmatpush1.msra.mxu0 0.0
        %334 = vmatprep.subr.mxu0 0.0
        %335 = vmatpush1.msra.mxu0 0.0
        %336 = vmatprep.subr.mxu0 0.0
        %337 = vmatpush1.msra.mxu0 %v304
        %338 = vmatprep.subr.mxu0 0.0
        %339 = vmatpush2.msra.mxu0 0.0
        %340 = vmatprep.subr.mxu0 0.0
        %341 = vmatpush2.msra.mxu0 0.0
        %342 = vmatprep.subr.mxu0 0.0
        %343 = vmatpush2.msra.mxu0 0.0
        %344 = vmatprep.subr.mxu0 0.0
        %345 = vmatpush2.msra.mxu0 0.0
        %346 = vmatprep.subr.mxu0 0.0
        %347 = vmatpush2.msra.mxu0 0.0
        %348 = vmatprep.subr.mxu0 0.0
        %349 = vmatpush2.msra.mxu0 0.0
        %350 = vmatprep.subr.mxu0 0.0
        %351 = vmatpush2.msra.mxu0 0.0
        %352 = vmatprep.subr.mxu0 0.0
        %353 = vmatpush2.msra.mxu0 0.0
        %354 = vmatprep.subr.mxu0 0.0
        %355 = vmatpush2.msra.mxu0 0.0
        %356 = vmatprep.subr.mxu0 0.0
        %357 = vmatpush2.msra.mxu0 0.0
        %358 = vmatprep.subr.mxu0 0.0
        %359 = vmatpush2.msra.mxu0 0.0
        %360 = vmatprep.subr.mxu0 0.0
        %361 = vmatpush2.msra.mxu0 0.0
        %362 = vmatprep.subr.mxu0 0.0
        %363 = vmatpush2.msra.mxu0 0.0
        %364 = vmatprep.subr.mxu0 0.0
        %365 = vmatpush2.msra.mxu0 0.0
        %366 = vmatprep.subr.mxu0 0.0
        %367 = vmatpush2.msra.mxu0 0.0
        %368 = vmatprep.subr.mxu0 0.0
        %369 = vmatpush2.msra.mxu0 0.0
        %370 = vmatprep.mubr.f32.mxu0 0.0
        %371 = vmatmul.mubr.f32.gmra.mxu0 %v301
        %v372 = vpop.f32.mrf.mxu0
        %v373 = vadd.f32 %v292, %v372
        %v374 = vpop.f32.mrf.mxu0
        %375 = vdwg.mxu0
        %v376 = vmax.f32 %v373, 0.0
        %v377 = vld [vmem:[%s4] sm:$0x3]
        %v378 = vld [vmem:[%s5] sm:$0x1]
        %vm379 = vcmask 15360
        %v381 = vsel %vm379, %v376, 0
        %vm383 = vcmask 1041408
        %v385 = vsel %vm383, %v377, 0
        %387 = vmatprep.subr.mxu0 0.0
        %388 = vmatpush1.msra.mxu0 0.0
        %389 = vmatprep.subr.mxu0 0.0
        %390 = vmatpush1.msra.mxu0 0.0
        %391 = vmatprep.subr.mxu0 0.0
        %392 = vmatpush1.msra.mxu0 0.0
        %393 = vmatprep.subr.mxu0 0.0
        %394 = vmatpush1.msra.mxu0 0.0
        %395 = vmatprep.subr.mxu0 0.0
        %396 = vmatpush1.msra.mxu0 0.0
        %397 = vmatprep.subr.mxu0 0.0
        %398 = vmatpush1.msra.mxu0 0.0
        %399 = vmatprep.subr.mxu0 0.0
        %400 = vmatpush1.msra.mxu0 0.0
        %401 = vmatprep.subr.mxu0 0.0
        %402 = vmatpush1.msra.mxu0 0.0
        %403 = vmatprep.subr.mxu0 0.0
        %404 = vmatpush1.msra.mxu0 0.0
        %405 = vmatprep.subr.mxu0 0.0
        %406 = vmatpush1.msra.mxu0 0.0
        %407 = vmatprep.subr.mxu0 0.0
        %408 = vmatpush1.msra.mxu0 0.0
        %409 = vmatprep.subr.mxu0 0.0
        %410 = vmatpush1.msra.mxu0 0.0
        %411 = vmatprep.subr.mxu0 0.0
        %412 = vmatpush1.msra.mxu0 0.0
        %413 = vmatprep.subr.mxu0 0.0
        %414 = vmatpush1.msra.mxu0 0.0
        %415 = vmatprep.subr.mxu0 0.0
        %416 = vmatpush1.msra.mxu0 0.0
        %417 = vmatprep.subr.mxu0 0.0
        %418 = vmatpush1.msra.mxu0 %v385
        %419 = vmatprep.subr.mxu0 0.0
        %420 = vmatpush2.msra.mxu0 0.0
        %421 = vmatprep.subr.mxu0 0.0
        %422 = vmatpush2.msra.mxu0 0.0
        %423 = vmatprep.subr.mxu0 0.0
        %424 = vmatpush2.msra.mxu0 0.0
        %425 = vmatprep.subr.mxu0 0.0
        %426 = vmatpush2.msra.mxu0 0.0
        %427 = vmatprep.subr.mxu0 0.0
        %428 = vmatpush2.msra.mxu0 0.0
        %429 = vmatprep.subr.mxu0 0.0
        %430 = vmatpush2.msra.mxu0 0.0
        %431 = vmatprep.subr.mxu0 0.0
        %432 = vmatpush2.msra.mxu0 0.0
        %433 = vmatprep.subr.mxu0 0.0
        %434 = vmatpush2.msra.mxu0 0.0
        %435 = vmatprep.subr.mxu0 0.0
        %436 = vmatpush2.msra.mxu0 0.0
        %437 = vmatprep.subr.mxu0 0.0
        %438 = vmatpush2.msra.mxu0 0.0
        %439 = vmatprep.subr.mxu0 0.0
        %440 = vmatpush2.msra.mxu0 0.0
        %441 = vmatprep.subr.mxu0 0.0
        %442 = vmatpush2.msra.mxu0 0.0
        %443 = vmatprep.subr.mxu0 0.0
        %444 = vmatpush2.msra.mxu0 0.0
        %445 = vmatprep.subr.mxu0 0.0
        %446 = vmatpush2.msra.mxu0 0.0
        %447 = vmatprep.subr.mxu0 0.0
        %448 = vmatpush2.msra.mxu0 0.0
        %449 = vmatprep.subr.mxu0 0.0
        %450 = vmatpush2.msra.mxu0 0.0
        %451 = vmatprep.mubr.f32.mxu0 0.0
        %452 = vmatmul.mubr.f32.gmra.mxu0 %v381
        %v453 = vpop.f32.mrf.mxu0
        %v454 = vadd.f32 %v378, %v453
        %v455 = vpop.f32.mrf.mxu0
        %456 = vdwg.mxu0
        %vm457 = vcmask 24576
        %v458 = vsel %vm457, %v454, -inf
        %459 = vmax.xlane.f32.xlu0 %v458
        %v460 = vpop.xlane.xlu0 %459
        %v461 = vsub.f32 %v454, %v460
        %v462 = vmul.f32 %v461, 1.442695
        %v463 = vpow.pop %v462
        %v464 = vsel %vm457, %v463, 0.0
        %465 = vadd.xlane.f32.xlu0 %v464
        %v466 = vpop.xlane.xlu0 %465
        %v467 = vrcp.pop %v466
        %v468 = vmul.f32 %v463, %v467
        %v469 = vlaneseq
        %v470 = vshrl.u32 %v469, 7
        %v471 = vsub.s32 0, %v470
        %v472 = vrot.slane %v468, %v471
        %474 = vbcast.lane.b32.xlu0 %v472, 256
        %v475 = vpop.permute.xlu0 %474
        %v478 = vunpack.c.l.s4 839922192
        %v479 = vunpack.c.0.s8 %v478
        %v480 = vlaneseq
        %v481 = vshrl.u32 %v480, 7
        %v482 = vsub.s32 %v479, %v481
        %v483 = vrot.slane %v475, %v482
        %v485 = vmul.f32 %v268, %v483
        %486 = vst [vmem:[%s267] sm:$0xff] %v485
        %s487 = sand.u32 %s162, 1
        %s488 = scalar_lea.sflag [#allocation4], %s487
        %s489 = sand.u32 %s162, 1
        %s490 = smul.addr %s489, 8
        %s491 = scalar_lea.vmem [#allocation5], %s490
        // Predicated region
        $region49: #{tpu_custom_call.1} parent=43 // pred_check
          %p492 = pneg %p172
        $region50: #{tpu_custom_call.1} parent=43 // pred_check_branch
          %494 = sbr.rel (%p492) target = $region52
        $region51: #{tpu_custom_call.1} parent=43 // pred_region
          %s496 = ssub.s32 128, 128
          %497 = vsyncadd %s488, %s496
          %s498 = smul.addr %s23, 2
          %s499 = smul.addr %s498, 64
          %s500 = scalar_lea.hbm %s6, %s499
          %s502 = sshll.u32 %s491, 4
          %s503 = int_to_ptr.vmem [resolvable:$true] %s502
          %505 = dma.vmem_to_hbm [thread:$0]  %s503, 128, %s500, %s488
        $region52: #{tpu_custom_call.1} parent=43 // pred_fallthru
          _
      $region44: #{tpu_custom_call.1} parent=5 // pred_fallthru
        _
      %p506 = scmp.le.s32.totalorder 2, %s18
      // Predicated region
      $region53: #{tpu_custom_call.1} parent=5 // pred_check
        %p507 = pneg %p506
      $region54: #{tpu_custom_call.1} parent=5 // pred_check_branch
        %509 = sbr.rel (%p507) target = $region56
      $region55: #{tpu_custom_call.1} parent=5 // pred_region
        %s510 = ssub.s32 %s18, 2
        // Predicated region
        $region57: #{tpu_custom_call.1} parent=55 // pred_check
          %p511 = pneg %p178
        $region58: #{tpu_custom_call.1} parent=55 // pred_check_branch
          %513 = sbr.rel (%p511) target = $region60
        $region59: #{tpu_custom_call.1} parent=55 // pred_region
          %s514 = sand.u32 %s163, 1
          %s515 = scalar_lea.sflag [#allocation4], %s514
          %s516 = sand.u32 %s163, 1
          %s517 = smul.addr %s516, 8
          %s518 = scalar_lea.vmem [#allocation5], %s517
          %519 = dma.done %s515, 128
        $region60: #{tpu_custom_call.1} parent=55 // pred_fallthru
          _
      $region56: #{tpu_custom_call.1} parent=5 // pred_fallthru
        _
    $region6: #{tpu_custom_call.1} parent=1 // loop_footer
      %s22 = sadd.s32 1, %s18
    $region7: #{tpu_custom_call.1} parent=1 // loop_footer_branch
      %17 = sbr.rel target = $region3
    $region8: #{tpu_custom_call.1} parent=1 // loop_exit
      _
    %520 = vsyncpa [#allocation3], 1
    %s521 = scalar_lea.sflag [#allocation3], 1
    %522 = vsyncpa %s521, 1
    %523 = vsyncpa [#allocation4], 1
    %s524 = scalar_lea.sflag [#allocation4], 1
    %525 = vsyncpa %s524, 1

</llo_original>
